<compile_context>
chip_gen: v7x
topology: tpu7x:2x2x1
jax: 0.10.0
libtpu: 0.0.40
codegen_flags: <defaults>
</compile_context>

<pallas_src>
from functools import lru_cache

import numpy as np
import jax
import jax.numpy as jnp
from jax.experimental import pallas as pl
from jax.experimental.pallas import tpu as pltpu


_TARGET_BLOCK_BYTES = 2 << 20          # ~2 MiB input tile (85%+ of HBM roofline)
_VMEM_LIMIT_BYTES = 48 * 1024 * 1024   # safe under v7x's 64 MiB physical VMEM


def _make_hpf_kernel(radius: int, L: int):
    """Kernel for y = x - mean(x[j-r .. j+r]) along the lane axis (zero padded)."""
    r = int(radius)
    kw = 2 * r + 1
    inv_kw = 1.0 / float(kw)

    def shifted(v, col, k):
        # Zero-padded lane shift: result[:, j] = v[:, j-k] if 0 <= j-k < L else 0.
        # k > 0 shifts toward higher lane indices, k < 0 toward lower ones.
        if k == 0:
            return v
        if abs(k) >= L:
            return jnp.zeros_like(v)
        rolled = pltpu.roll(v, shift=k % L, axis=1)     # XLU rotate, lane-aligned
        if k > 0:
            return jnp.where(col >= k, rolled, 0.0)     # zero the wrapped left edge
        return jnp.where(col < L + k, rolled, 0.0)      # zero the wrapped right edge

    def one_sided(v, col, sign):
        # sum_{t=1..r} v[:, j - sign*t] with zero padding, via log-shift doubling.
        #   P_w[j] = sum_{t=1..w} v[j - sign*t];  P_{2w} = P_w + shift(P_w, sign*w)
        # then combine powers following the binary decomposition of r.
        p = shifted(v, col, sign)   # width-1 partial (offset sign*1)
        width = 1
        acc = None
        acc_w = 0
        rem = r
        while True:
            if rem & 1:
                if acc is None:
                    acc, acc_w = p, width
                else:
                    acc = acc + shifted(p, col, sign * acc_w)
                    acc_w += width
            rem >>= 1
            if rem == 0:
                break
            p = p + shifted(p, col, sign * width)
            width *= 2
        return acc

    def kernel(x_ref, o_ref):
        x = x_ref[...].astype(jnp.float32)
        col = jax.lax.broadcasted_iota(jnp.int32, x.shape, 1)   # lane index, hoisted
        left = one_sided(x, col, +1)    # sum of x[j-1 .. j-r]
        right = one_sided(x, col, -1)   # sum of x[j+1 .. j+r]
        window = x + left + right       # box window sum of width 2r+1
        o_ref[...] = (x - window * inv_kw).astype(o_ref.dtype)

    return kernel


def _choose_block_rows(n_rows: int, row_bytes: int) -> int:
    """Row-tile size: ~2 MiB input blocks, (8,128)-legal, >=2 grid steps when possible."""
    budget_rows = max(1, _TARGET_BLOCK_BYTES // max(row_bytes, 1))
    if budget_rows >= n_rows:
        # Whole row axis fits in one tile.  If there are enough rows, split into
        # two blocks so dimension_semantics=("parallel",) can use both v7x TCs.
        if n_rows >= 16:
            half = -(-n_rows // 2)
            br = -(-half // 8) * 8          # round up to multiple of 8
            if br < n_rows:
                return br
        return n_rows
    br = max(8, (budget_rows // 8) * 8)     # non-full block dim must be /8
    return min(br, n_rows)


@lru_cache(maxsize=None)
def _build_hpf_call(radius: int, n_rows: int, L: int, dtype_name: str, br: int):
    """Memoized pallas_call per (radius, shape, dtype, block) -> no per-call retrace."""
    dtype = jnp.dtype(dtype_name)
    call = pl.pallas_call(
        _make_hpf_kernel(radius, L),
        out_shape=jax.ShapeDtypeStruct((n_rows, L), dtype),
        grid=(pl.cdiv(n_rows, br),),
        in_specs=[pl.BlockSpec((br, L), lambda i: (i, 0))],
        out_specs=pl.BlockSpec((br, L), lambda i: (i, 0)),
        compiler_params=pltpu.CompilerParams(
            dimension_semantics=("parallel",),       # rows are independent
            vmem_limit_bytes=_VMEM_LIMIT_BYTES,
        ),
    )
    return jax.jit(call)


def high_pass_filter(x, radius: int):
    """Pallas TPU implementation of x - box_filter(x, width=2*radius+1) on the last axis."""
    radius = int(radius)
    if radius <= 0:
        return jnp.zeros_like(x)   # width-1 box filter is identity -> x - x == 0

    orig_shape = x.shape
    L = int(orig_shape[-1])
    n_rows = 1
    for s in orig_shape[:-1]:
        n_rows *= int(s)
    n_rows = max(n_rows, 1)

    # Contiguous reshape -> metadata only.  Full (lane-dense) last dim per block
    # keeps stores unmasked full-width vst as long as L % 128 == 0.
    x2d = x.reshape(n_rows, L)
    itemsize = jnp.dtype(x.dtype).itemsize
    br = _choose_block_rows(n_rows, L * itemsize)

    call = _build_hpf_call(radius, n_rows, L, jnp.dtype(x.dtype).name, br)
    return call(x2d).reshape(orig_shape)


class RandomHighPassFilter:
    """JAX/Pallas port of the torch RandomHighPassFilter transform."""

    def __init__(self, filter_prob: float = 0.25, max_kernel_radius: int = 5):
        self.filter_prob = float(filter_prob)
        self.max_kernel_radius = int(max_kernel_radius)

    def forward(self, x, rng=None):
        # Host-side randomness, mirroring the torch module's np.random usage.
        rng = np.random.default_rng() if rng is None else rng
        if rng.random() < self.filter_prob:
            radius = int(rng.integers(1, self.max_kernel_radius + 1))
            return high_pass_filter(x, radius)
        # lpf is identity in this branch -> x - x == 0 exactly (matches torch module).
        return jnp.zeros_like(x)

    __call__ = forward


def _hpf_reference(x, r):
    kw = 2 * r + 1
    pad = [(0, 0)] * (x.ndim - 1) + [(r, r)]
    xp = jnp.pad(x, pad)
    lp = sum(xp[..., d:d + x.shape[-1]] for d in range(kw)) / kw
    return x - lp


if __name__ == "__main__":
    key = jax.random.PRNGKey(0)
    # conv1d with a (1, 1, kw) kernel implies (batch, channels=1, length) inputs.
    x = jax.random.normal(key, (2, 1, 256), dtype=jnp.float32)

    # Deterministic check of the Pallas kernel vs a pure-jnp reference, all radii.
    for r in range(1, 6):
        y = jax.block_until_ready(high_pass_filter(x, r))
        assert y.shape == x.shape and y.dtype == x.dtype
        err = float(jnp.max(jnp.abs(y - _hpf_reference(x, r))))
        assert err < 1e-5, f"radius {r}: max abs error {err}"

    # Exercise the multi-block path (row split for megacore + partial last block).
    x2 = jax.random.normal(jax.random.PRNGKey(1), (72, 1, 384), dtype=jnp.float32)
    y2 = jax.block_until_ready(high_pass_filter(x2, 5))
    err2 = float(jnp.max(jnp.abs(y2 - _hpf_reference(x2, 5))))
    assert err2 < 1e-5, f"multi-block: max abs error {err2}"

    # Exercise the random transform (forced filter branch + forced identity branch).
    rng = np.random.default_rng(0)
    t_on = RandomHighPassFilter(filter_prob=1.0, max_kernel_radius=5)
    y_on = jax.block_until_ready(t_on(x, rng=rng))
    assert y_on.shape == x.shape and y_on.dtype == x.dtype

    t_off = RandomHighPassFilter(filter_prob=0.0)
    y_off = jax.block_until_ready(t_off(x))
    assert float(jnp.max(jnp.abs(y_off))) == 0.0

    print("KERNEL_OK")
</pallas_src>

<mosaic_0001>
module attributes {stable_mosaic.version = 11 : i64} {
  func.func @kernel(%arg0: i32, %arg1: memref<2x256xf32, #tpu.memory_space<vmem>>, %arg2: memref<2x256xf32, #tpu.memory_space<vmem>>) attributes {dimension_semantics = [#tpu.dimension_semantics<parallel>], iteration_bounds = array<i64: 1>, scalar_prefetch = 0 : i64, scratch_operands = 0 : i64, tpu.core_type = #tpu.core_type<tc>, window_params = [{transform_indices = @transform_0, window_bounds = array<i64: 2, 256>}, {transform_indices = @transform_1, window_bounds = array<i64: 2, 256>}]} {
    %c0 = arith.constant 0 : index
    %c0_0 = arith.constant 0 : index
    %0 = vector.load %arg1[%c0, %c0_0] : memref<2x256xf32, #tpu.memory_space<vmem>>, vector<2x256xf32>
    %1 = tpu.iota {dimensions = array<i32: 1>} : vector<2x256xi32>
    %c1_i32 = arith.constant 1 : i32
    %2 = tpu.dynamic_rotate %0 by %c1_i32 dim 1 : vector<2x256xf32>, i32 -> vector<2x256xf32>
    %c1_i32_1 = arith.constant 1 : i32
    %3 = vector.broadcast %c1_i32_1 : i32 to vector<2x256xi32>
    %4 = arith.cmpi sge, %1, %3 : vector<2x256xi32>
    %cst = arith.constant 0.000000e+00 : f32
    %5 = vector.broadcast %cst : f32 to vector<2x256xf32>
    %6 = arith.select %4, %2, %5 : vector<2x256xi1>, vector<2x256xf32>
    %c255_i32 = arith.constant 255 : i32
    %7 = tpu.dynamic_rotate %0 by %c255_i32 dim 1 : vector<2x256xf32>, i32 -> vector<2x256xf32>
    %c255_i32_2 = arith.constant 255 : i32
    %8 = vector.broadcast %c255_i32_2 : i32 to vector<2x256xi32>
    %9 = arith.cmpi slt, %1, %8 : vector<2x256xi32>
    %cst_3 = arith.constant 0.000000e+00 : f32
    %10 = vector.broadcast %cst_3 : f32 to vector<2x256xf32>
    %11 = arith.select %9, %7, %10 : vector<2x256xi1>, vector<2x256xf32>
    %12 = arith.addf %0, %6 : vector<2x256xf32>
    %13 = arith.addf %12, %11 : vector<2x256xf32>
    %cst_4 = arith.constant 0.333333343 : f32
    %14 = vector.broadcast %cst_4 : f32 to vector<2x256xf32>
    %15 = arith.mulf %13, %14 : vector<2x256xf32>
    %16 = arith.subf %0, %15 : vector<2x256xf32>
    %c0_5 = arith.constant 0 : index
    %c0_6 = arith.constant 0 : index
    %17 = vector.load %arg2[%c0_5, %c0_6] : memref<2x256xf32, #tpu.memory_space<vmem>>, vector<2x256xf32>
    tpu.vector_store %arg2[%c0_5, %c0_6], %16 {strides = array<i32>} : memref<2x256xf32, #tpu.memory_space<vmem>>, vector<2x256xf32>,
    return
  }
  func.func @transform_0(%arg0: i32) -> (i32, i32) {
    %c0_i32 = arith.constant 0 : i32
    %c0_i32_0 = arith.constant 0 : i32
    return %arg0, %c0_i32 : i32, i32
  }
  func.func @transform_1(%arg0: i32) -> (i32, i32) {
    %c0_i32 = arith.constant 0 : i32
    %c0_i32_0 = arith.constant 0 : i32
    return %arg0, %c0_i32 : i32, i32
  }
}

</mosaic_0001>

<llo_original>
// kernel: tpu_custom_call.1
$region0: #{tpu_custom_call.1}
  #allocation0 [shape = 'u32[]', space=smem, size = 0x4, offset = 0x4, fixed_abs, tag = 'smem constant byte address 0x4 - core index']
  #allocation1 [shape = 'u32[144,128]{1,0:T(1,128)}', space=vmem, size = 0x12000, scoped, tag = 'internal scratch']
  %s0 = inlined_call_operand.hbm [shape: f32[2,256], index: 0, kind: input, shape index: {}]
  %s1 = inlined_call_operand.hbm [shape: f32[2,256], index: 1, kind: output, shape index: {}]
  %s2 = sld [smem:[#allocation0]]
  $region18: #{tpu_custom_call.1} parent=0
    _
  %s4 = ssub.s32 1, %s2
  %s5 = scalar_select 0, %s4, %s2
  $region1: #{tpu_custom_call.1} parent=0
    #allocation2 [shape = 'u8[2048]{0}', space=vmem, size = 0x800, scoped, tag = 'input window, operand 0, single buffered']
    #allocation3 [shape = 's32[1]{0}', space=sflag, size = 0x4, scoped, tag = 'scoped memory for tpu_custom_call.1']
    #allocation4 [shape = 's32[1]{0}', space=sflag, size = 0x4, scoped, tag = 'scoped memory for tpu_custom_call.1']
    #allocation5 [shape = 'u8[2048]{0}', space=vmem, size = 0x800, scoped, tag = 'output window, operand 0, single buffered']
    %6 = vsyncpa [#allocation3], 0
    %7 = vsyncpa [#allocation4], 0
    // Predicated region
    $region2: #{tpu_custom_call.1} parent=1 // pred_check
      _
    $region3: #{tpu_custom_call.1} parent=1 // pred_check_branch
      %9 = sbr.rel (0) target = $region5
    $region4: #{tpu_custom_call.1} parent=1 // pred_region
      %s11 = ssub.s32 64, 64
      %12 = vsyncadd [#allocation3], %s11
      %s14 = sshll.u32 [#allocation2], 4
      %s15 = int_to_ptr.vmem [resolvable:$true] %s14
      %17 = dma.hbm_to_vmem [thread:$0]  %s0, 64, %s15, [#allocation3]
    $region5: #{tpu_custom_call.1} parent=1 // pred_fallthru
      _
    // Predicated region
    $region6: #{tpu_custom_call.1} parent=1 // pred_check
      _
    $region7: #{tpu_custom_call.1} parent=1 // pred_check_branch
      %19 = sbr.rel (0) target = $region9
    $region8: #{tpu_custom_call.1} parent=1 // pred_region
      %20 = dma.done [#allocation3], 64
    $region9: #{tpu_custom_call.1} parent=1 // pred_fallthru
      _
    %v21 = vld [vmem:[#allocation2] sm:$0xf]
    %v22 = vlaneseq
    %v23 = vand.u32 %v22, 127
    %v24 = vadd.s32 %v23, 128
    %v27 = vunpack.c.l.s4 1983009808
    %v28 = vunpack.c.0.s8 %v27
    %v29 = vlaneseq
    %v30 = vshrl.u32 %v29, 7
    %v31 = vsub.s32 %v28, %v30
    %v32 = vrot.slane %v21, %v31
    %v33 = vcombine.high %v32, %v32
    %36 = vrot.lane.b32.xlu0 %v32, 1
    %v37 = vpop.permute.xlu0 %36
    %38 = vrot.lane.b32.xlu0 %v33, 1
    %v39 = vpop.permute.xlu0 %38
    %vm40 = vcmp.lt.s32.totalorder %v23, 1
    %v41 = vsel %vm40, %v37, %v39
    %v42 = vsel %vm40, %v39, %v37
    %vm43 = vcmp.ge.s32.totalorder %v23, 1
    %vm44 = vcmp.ge.s32.totalorder %v24, 1
    %v45 = vsel %vm43, %v42, 0.0
    %v46 = vsel %vm44, %v41, 0.0
    %47 = vrot.lane.b32.xlu0 %v32, 127
    %v48 = vpop.permute.xlu0 %47
    %49 = vrot.lane.b32.xlu0 %v33, 127
    %v50 = vpop.permute.xlu0 %49
    %vm51 = vcmp.lt.s32.totalorder %v23, 127
    %v52 = vsel %vm51, %v48, %v50
    %v53 = vsel %vm51, %v50, %v48
    %vm54 = vcmp.lt.s32.totalorder %v23, 255
    %vm55 = vcmp.lt.s32.totalorder %v24, 255
    %v56 = vsel %vm54, %v52, 0.0
    %v57 = vsel %vm55, %v53, 0.0
    %v60 = vcombine.low %v45, %v46
    %v62 = vunpack.c.l.s4 1983009808
    %v63 = vunpack.c.0.s8 %v62
    %v64 = vlaneseq
    %v65 = vshrl.u32 %v64, 7
    %v66 = vsub.s32 %v63, %v65
    %v67 = vrot.slane %v60, %v66
    %v69 = vadd.f32 %v21, %v67
    %v72 = vcombine.low %v56, %v57
    %v74 = vunpack.c.l.s4 1983009808
    %v75 = vunpack.c.0.s8 %v74
    %v76 = vlaneseq
    %v77 = vshrl.u32 %v76, 7
    %v78 = vsub.s32 %v75, %v77
    %v79 = vrot.slane %v72, %v78
    %v81 = vadd.f32 %v69, %v79
    %v82 = vmul.f32 %v81, 0.33333334
    %v83 = vsub.f32 %v21, %v82
    %84 = vst [vmem:[#allocation5] sm:$0xf] %v83
    // Predicated region
    $region10: #{tpu_custom_call.1} parent=1 // pred_check
      _
    $region11: #{tpu_custom_call.1} parent=1 // pred_check_branch
      %86 = sbr.rel (0) target = $region13
    $region12: #{tpu_custom_call.1} parent=1 // pred_region
      %s88 = ssub.s32 64, 64
      %89 = vsyncadd [#allocation4], %s88
      %s91 = sshll.u32 [#allocation5], 4
      %s92 = int_to_ptr.vmem [resolvable:$true] %s91
      %94 = dma.vmem_to_hbm [thread:$0]  %s92, 64, %s1, [#allocation4]
    $region13: #{tpu_custom_call.1} parent=1 // pred_fallthru
      _
    // Predicated region
    $region14: #{tpu_custom_call.1} parent=1 // pred_check
      _
    $region15: #{tpu_custom_call.1} parent=1 // pred_check_branch
      %96 = sbr.rel (0) target = $region17
    $region16: #{tpu_custom_call.1} parent=1 // pred_region
      %97 = dma.done [#allocation4], 64
    $region17: #{tpu_custom_call.1} parent=1 // pred_fallthru
      _
    %98 = vsyncpa [#allocation3], 1
    %99 = vsyncpa [#allocation4], 1

</llo_original>
